<compile_context>
chip_gen: v5e
topology: v5e:2x2
jax: 0.10.0
libtpu: 0.0.40
codegen_flags: <defaults>
</compile_context>

<pallas_src>
import functools

import jax
import jax.numpy as jnp
from jax.experimental import pallas as pl
from jax.experimental.pallas import tpu as pltpu


def _round_up(x: int, m: int) -> int:
    return ((x + m - 1) // m) * m


def _cdiv(a: int, b: int) -> int:
    return -(-a // b)


# --------------------------------------------------------------------------
# Kernels (feature-major layout: batch on the 128-wide lane axis)
# --------------------------------------------------------------------------
def _mf_gather_kernel(mol_idx_ref, task_idx_ref, mol_tbl_ref, task_tbl_ref,
                      w1m_ref, w1t_ref, b1_ref, w2_ref, b2_ref, out_ref, *,
                      classification: bool):
    # mol_idx_ref/task_idx_ref : (1, TN) int32   streamed index tiles
    # mol_tbl_ref/task_tbl_ref : (E, Vp)         VMEM-resident tables (transposed,
    #                                            vocab padded to a multiple of 128)
    # w1m_ref/w1t_ref          : (H, E)          W1 split into mol/task halves
    # b1_ref                   : (H, 1)          resident
    # w2_ref                   : (H, 1)          second-layer weights (1 output unit)
    # b2_ref                   : (1, 1)          scalar bias in SMEM
    # out_ref                  : (1, TN)         lane-dense output row
    tn = out_ref.shape[1]
    vm = mol_tbl_ref.shape[1]
    vt = task_tbl_ref.shape[1]
    tbl_dtype = mol_tbl_ref.dtype

    # In-kernel embedding gather as one-hot(ids) @ table on the MXU.  One-hot
    # rows select table columns exactly (adding zeros is exact in f32), so this
    # matches an nn.Embedding lookup bit-for-bit (modulo the optional bf16 cast
    # of the table itself).  Padded vocab rows are never selected (ids < vocab).
    mol_oh = (jax.lax.broadcasted_iota(jnp.int32, (vm, tn), 0)
              == mol_idx_ref[...]).astype(tbl_dtype)                   # (Vm, TN)
    task_oh = (jax.lax.broadcasted_iota(jnp.int32, (vt, tn), 0)
               == task_idx_ref[...]).astype(tbl_dtype)                 # (Vt, TN)
    mol_t = jnp.dot(mol_tbl_ref[...], mol_oh,
                    preferred_element_type=jnp.float32).astype(tbl_dtype)   # (E, TN)
    task_t = jnp.dot(task_tbl_ref[...], task_oh,
                     preferred_element_type=jnp.float32).astype(tbl_dtype)  # (E, TN)

    # Layer 1 with W1 split into its mol/task halves (concat never materialized).
    h = (jnp.dot(w1m_ref[...], mol_t, preferred_element_type=jnp.float32)
         + jnp.dot(w1t_ref[...], task_t, preferred_element_type=jnp.float32)
         + b1_ref[...])                          # (H, TN), f32 accumulation
    h = jnp.maximum(h, 0.0)                      # ReLU; dropout = identity (eval)

    # Layer 2 (H -> 1): VPU multiply + sublane reduction; result stays lane-dense.
    o = jnp.sum(h * w2_ref[...], axis=0, keepdims=True) + b2_ref[0, 0]  # (1, TN)
    if classification:
        o = jax.nn.sigmoid(o)
    out_ref[...] = o


def _mf_stream_kernel(mol_ref, task_ref, w1m_ref, w1t_ref, b1_ref, w2_ref,
                      b2_ref, out_ref, *, classification: bool):
    # Fallback path: pre-gathered (E, TN) activation tiles streamed from HBM.
    h = (jnp.dot(w1m_ref[...], mol_ref[...], preferred_element_type=jnp.float32)
         + jnp.dot(w1t_ref[...], task_ref[...], preferred_element_type=jnp.float32)
         + b1_ref[...])                          # (H, TN), f32 accumulation
    h = jnp.maximum(h, 0.0)                      # ReLU; dropout = identity (eval)
    o = jnp.sum(h * w2_ref[...], axis=0, keepdims=True) + b2_ref[0, 0]  # (1, TN)
    if classification:
        o = jax.nn.sigmoid(o)
    out_ref[...] = o


# --------------------------------------------------------------------------
# Wrapper
# --------------------------------------------------------------------------
def matrix_factorizer_forward(mol_indices, task_indices, params, *,
                              classification: bool = True,
                              block_cols: int = 8192,
                              use_bf16: bool = True,
                              gather_in_kernel=None):
    """Eval-mode forward pass. Returns shape (N,) float32."""
    mol_idx = jnp.asarray(mol_indices, jnp.int32)
    task_idx = jnp.asarray(task_indices, jnp.int32)
    n = mol_idx.shape[0]

    num_mols, e = params["mol_embedding"].shape
    num_tasks = params["task_embedding"].shape[0]
    hdim = params["W1_w"].shape[1]
    compute_dtype = jnp.bfloat16 if use_bf16 else jnp.float32
    itemsize = 2 if use_bf16 else 4

    # Vocab sizes padded to 128 so the in-kernel one-hot matmuls are fully
    # (8,128)-aligned; padded rows are zero and never selected.
    vm_p = _round_up(num_mols, 128)
    vt_p = _round_up(num_tasks, 128)

    # Primary path: gather inside the kernel from VMEM-resident tables.
    # Fall back to XLA row-gather + streamed activations only for large vocabs.
    if gather_in_kernel is None:
        tbl_bytes = (vm_p + vt_p) * e * itemsize
        gather_in_kernel = (vm_p + vt_p) <= 2048 and tbl_bytes <= (8 << 20)

    # ---- Weights (shared by both paths) ------------------------------------
    # Split W1 so concat([mol_emb, task_emb]) never exists; transpose the halves
    # for the feature-major matmul.  b1/W2/b2 stay f32 (post-accumulation math).
    w1m = params["W1_w"][:e, :].T.astype(compute_dtype)        # (H, E)
    w1t = params["W1_w"][e:, :].T.astype(compute_dtype)        # (H, E)
    b1 = params["W1_b"].astype(jnp.float32)[:, None]           # (H, 1)
    w2 = params["W2_w"].astype(jnp.float32)                    # (H, 1)
    b2 = params["W2_b"].astype(jnp.float32).reshape(1, 1)      # (1, 1) -> SMEM

    # ---- Batch-tile selection with an explicit VMEM budget ------------------
    # Budget ~20 MiB so the kernel stays well inside the 32 MiB scoped limit
    # (and far inside v7x's 64 MiB physical VMEM).
    if gather_in_kernel:
        per_col = (2 * 4 * 2                       # int32 index streams, 2x buffered
                   + 4 * 2                         # f32 output stream, 2x buffered
                   + (vm_p + vt_p) * itemsize      # one-hot intermediates
                   + 2 * e * 4                     # gathered (E, TN) intermediates
                   + hdim * 4)                     # (H, TN) hidden
    else:
        per_col = (2 * e * itemsize * 2            # (E, TN) activation streams, 2x buf
                   + 2 * e * 4                     # in-kernel copies (headroom)
                   + hdim * 4                      # (H, TN) hidden
                   + 4 * 2)                        # output stream
    budget = 20 * 1024 * 1024
    tn_cap = max(128, (budget // per_col) // 128 * 128)

    n128 = _round_up(max(n, 1), 128)
    tn = min(_round_up(block_cols, 128), n128, tn_cap)
    if tn >= n128 and n128 > 128:
        # Keep >= 2 grid steps so dimension_semantics=("parallel",) gives both
        # v7x TensorCores work.
        tn = _round_up(_cdiv(n128, 2), 128)
    num_tiles = _cdiv(n128, tn)
    n_pad = num_tiles * tn

    # Pad only the tiny int32 index vectors (never the big float activations).
    # Pad value 0 is a valid index; the padded tail is computed and dropped.
    mol_idx_p = jnp.pad(mol_idx, (0, n_pad - n))[None, :]       # (1, n_pad)
    task_idx_p = jnp.pad(task_idx, (0, n_pad - n))[None, :]     # (1, n_pad)

    compiler_params = pltpu.CompilerParams(
        dimension_semantics=("parallel",),       # shard grid across TCs on v7x
        vmem_limit_bytes=32 * 1024 * 1024)
    out_shape = jax.ShapeDtypeStruct((1, n_pad), jnp.float32)
    out_spec = pl.BlockSpec((1, tn), lambda i: (0, i))           # lane-dense row

    if gather_in_kernel:
        # VMEM-resident transposed tables, vocab zero-padded to a 128 multiple.
        mol_tbl_t = jnp.pad(params["mol_embedding"].astype(compute_dtype).T,
                            ((0, 0), (0, vm_p - num_mols)))      # (E, Vm_p)
        task_tbl_t = jnp.pad(params["task_embedding"].astype(compute_dtype).T,
                             ((0, 0), (0, vt_p - num_tasks)))    # (E, Vt_p)
        kernel = functools.partial(_mf_gather_kernel,
                                   classification=classification)
        out = pl.pallas_call(
            kernel,
            out_shape=out_shape,
            grid=(num_tiles,),
            in_specs=[
                pl.BlockSpec((1, tn), lambda i: (0, i)),         # mol ids (streamed)
                pl.BlockSpec((1, tn), lambda i: (0, i)),         # task ids (streamed)
                pl.BlockSpec((e, vm_p), lambda i: (0, 0)),       # mol table (resident)
                pl.BlockSpec((e, vt_p), lambda i: (0, 0)),       # task table (resident)
                pl.BlockSpec((hdim, e), lambda i: (0, 0)),       # W1 mol half
                pl.BlockSpec((hdim, e), lambda i: (0, 0)),       # W1 task half
                pl.BlockSpec((hdim, 1), lambda i: (0, 0)),       # b1
                pl.BlockSpec((hdim, 1), lambda i: (0, 0)),       # W2
                pl.BlockSpec(memory_space=pltpu.MemorySpace.SMEM),  # b2 scalar
            ],
            out_specs=out_spec,
            compiler_params=compiler_params,
        )(mol_idx_p, task_idx_p, mol_tbl_t, task_tbl_t, w1m, w1t, b1, w2, b2)
    else:
        # Large-vocab fallback: row gather (already-padded indices) then
        # transpose to feature-major; stream the (E, n_pad) tiles.
        mol_t = jnp.take(params["mol_embedding"].astype(compute_dtype),
                         mol_idx_p[0], axis=0).T                 # (E, n_pad)
        task_t = jnp.take(params["task_embedding"].astype(compute_dtype),
                          task_idx_p[0], axis=0).T               # (E, n_pad)
        kernel = functools.partial(_mf_stream_kernel,
                                   classification=classification)
        out = pl.pallas_call(
            kernel,
            out_shape=out_shape,
            grid=(num_tiles,),
            in_specs=[
                pl.BlockSpec((e, tn), lambda i: (0, i)),         # mol tile (streamed)
                pl.BlockSpec((e, tn), lambda i: (0, i)),         # task tile (streamed)
                pl.BlockSpec((hdim, e), lambda i: (0, 0)),       # W1 mol half
                pl.BlockSpec((hdim, e), lambda i: (0, 0)),       # W1 task half
                pl.BlockSpec((hdim, 1), lambda i: (0, 0)),       # b1
                pl.BlockSpec((hdim, 1), lambda i: (0, 0)),       # W2
                pl.BlockSpec(memory_space=pltpu.MemorySpace.SMEM),  # b2 scalar
            ],
            out_specs=out_spec,
            compiler_params=compiler_params,
        )(mol_t, task_t, w1m, w1t, b1, w2, b2)

    return out[0, :n]   # drop padding; squeeze(dim=-1) equivalent


# --------------------------------------------------------------------------
# Pure-JAX reference and parameter init
# --------------------------------------------------------------------------
def _reference_forward(mol_indices, task_indices, params, *, classification=True):
    """Pure-JAX reference (mirrors the PyTorch module, eval mode)."""
    mol_emb = jnp.take(params["mol_embedding"], mol_indices, axis=0)
    task_emb = jnp.take(params["task_embedding"], task_indices, axis=0)
    joint = jnp.concatenate([mol_emb, task_emb], axis=1)
    h = jnp.maximum(joint @ params["W1_w"] + params["W1_b"], 0.0)
    o = h @ params["W2_w"] + params["W2_b"]
    if classification:
        o = jax.nn.sigmoid(o)
    return o[:, 0]


def init_params(key, num_mols, num_tasks, embedding_size, hidden_size):
    """Deterministic synthetic parameters (shapes match the nn.Module)."""
    k = jax.random.split(key, 6)
    return {
        # nn.Embedding(num_mols, E), nn.Embedding(num_tasks, E)
        "mol_embedding": jax.random.normal(k[0], (num_mols, embedding_size),
                                           jnp.float32),
        "task_embedding": jax.random.normal(k[1], (num_tasks, embedding_size),
                                            jnp.float32),
        # nn.Linear(2E, H): PyTorch weight is (H, 2E); stored here as (2E, H).
        "W1_w": jax.random.normal(k[2], (2 * embedding_size, hidden_size),
                                  jnp.float32) * 0.1,
        "W1_b": jax.random.normal(k[3], (hidden_size,), jnp.float32) * 0.1,
        # nn.Linear(H, 1): PyTorch weight is (1, H); stored here as (H, 1).
        "W2_w": jax.random.normal(k[4], (hidden_size, 1), jnp.float32) * 0.1,
        "W2_b": jax.random.normal(k[5], (1,), jnp.float32) * 0.1,
    }


if __name__ == "__main__":
    num_mols, num_tasks = 10, 5
    embedding_size, hidden_size = 32, 32
    batch = 8

    key = jax.random.PRNGKey(0)
    kp, km, kt = jax.random.split(key, 3)
    params = init_params(kp, num_mols, num_tasks, embedding_size, hidden_size)

    mol_indices = jax.random.randint(km, (batch,), 0, num_mols, jnp.int32)
    task_indices = jax.random.randint(kt, (batch,), 0, num_tasks, jnp.int32)

    ref = jax.block_until_ready(
        _reference_forward(mol_indices, task_indices, params,
                           classification=True))

    # 1) f32 + in-kernel gather (primary path: tables VMEM-resident).
    out_gather = jax.block_until_ready(matrix_factorizer_forward(
        mol_indices, task_indices, params, classification=True,
        use_bf16=False))
    assert out_gather.shape == (batch,)
    assert bool(jnp.all(jnp.isfinite(out_gather)))
    assert bool(jnp.allclose(out_gather, ref, atol=1e-5, rtol=1e-5))

    # 2) f32 + streamed-activation fallback (large-vocab path), forced here.
    out_stream = jax.block_until_ready(matrix_factorizer_forward(
        mol_indices, task_indices, params, classification=True,
        use_bf16=False, gather_in_kernel=False))
    assert out_stream.shape == (batch,)
    assert bool(jnp.allclose(out_stream, ref, atol=1e-5, rtol=1e-5))

    # 3) Default perf config: bf16 tables/W1 with f32 accumulation, in-kernel
    #    gather.  Looser tolerance (bf16 quantization of inputs).
    out_bf16 = jax.block_until_ready(matrix_factorizer_forward(
        mol_indices, task_indices, params, classification=True))
    assert out_bf16.shape == (batch,)
    assert bool(jnp.all(jnp.isfinite(out_bf16)))
    assert bool(jnp.allclose(out_bf16, ref, atol=2e-2, rtol=2e-2))

    print("KERNEL_OK")
</pallas_src>

<mosaic_0001>
module attributes {stable_mosaic.version = 11 : i64} {
  func.func @_mf_gather_kernel(%arg0: i32, %arg1: memref<1x128xi32, #tpu.memory_space<vmem>>, %arg2: memref<1x128xi32, #tpu.memory_space<vmem>>, %arg3: memref<32x128xf32, #tpu.memory_space<vmem>>, %arg4: memref<32x128xf32, #tpu.memory_space<vmem>>, %arg5: memref<32x32xf32, #tpu.memory_space<vmem>>, %arg6: memref<32x32xf32, #tpu.memory_space<vmem>>, %arg7: memref<32x1xf32, #tpu.memory_space<vmem>>, %arg8: memref<32x1xf32, #tpu.memory_space<vmem>>, %arg9: memref<1x1xf32, #tpu.memory_space<smem>>, %arg10: memref<1x128xf32, #tpu.memory_space<vmem>>) attributes {dimension_semantics = [#tpu.dimension_semantics<parallel>], iteration_bounds = array<i64: 1>, scalar_prefetch = 0 : i64, scratch_operands = 0 : i64, tpu.core_type = #tpu.core_type<tc>, window_params = [{transform_indices = @transform_0, window_bounds = array<i64: 1, 128>}, {transform_indices = @transform_1, window_bounds = array<i64: 1, 128>}, {pipeline_mode = #tpu.pipeline_mode<synchronous>, transform_indices = @transform_2, window_bounds = array<i64: 32, 128>}, {pipeline_mode = #tpu.pipeline_mode<synchronous>, transform_indices = @transform_3, window_bounds = array<i64: 32, 128>}, {pipeline_mode = #tpu.pipeline_mode<synchronous>, transform_indices = @transform_4, window_bounds = array<i64: 32, 32>}, {pipeline_mode = #tpu.pipeline_mode<synchronous>, transform_indices = @transform_5, window_bounds = array<i64: 32, 32>}, {pipeline_mode = #tpu.pipeline_mode<synchronous>, transform_indices = @transform_6, window_bounds = array<i64: 32, 1>}, {pipeline_mode = #tpu.pipeline_mode<synchronous>, transform_indices = @transform_7, window_bounds = array<i64: 32, 1>}, {transform_indices = @transform_8, window_bounds = array<i64: 1, 1>}, {transform_indices = @transform_9, window_bounds = array<i64: 1, 128>}]} {
    %0 = tpu.iota {dimensions = array<i32: 0>} : vector<128x128xi32>
    %c0 = arith.constant 0 : index
    %c0_0 = arith.constant 0 : index
    %1 = vector.load %arg1[%c0, %c0_0] : memref<1x128xi32, #tpu.memory_space<vmem>>, vector<1x128xi32>
    %2 = vector.broadcast %1 : vector<1x128xi32> to vector<128x128xi32>
    %3 = arith.cmpi eq, %0, %2 : vector<128x128xi32>
    %4 = arith.extui %3 : vector<128x128xi1> to vector<128x128xi32>
    %5 = arith.sitofp %4 : vector<128x128xi32> to vector<128x128xf32>
    %6 = tpu.iota {dimensions = array<i32: 0>} : vector<128x128xi32>
    %c0_1 = arith.constant 0 : index
    %c0_2 = arith.constant 0 : index
    %7 = vector.load %arg2[%c0_1, %c0_2] : memref<1x128xi32, #tpu.memory_space<vmem>>, vector<1x128xi32>
    %8 = vector.broadcast %7 : vector<1x128xi32> to vector<128x128xi32>
    %9 = arith.cmpi eq, %6, %8 : vector<128x128xi32>
    %10 = arith.extui %9 : vector<128x128xi1> to vector<128x128xi32>
    %11 = arith.sitofp %10 : vector<128x128xi32> to vector<128x128xf32>
    %c0_3 = arith.constant 0 : index
    %c0_4 = arith.constant 0 : index
    %12 = vector.load %arg3[%c0_3, %c0_4] : memref<32x128xf32, #tpu.memory_space<vmem>>, vector<32x128xf32>
    %cst = arith.constant dense<0.000000e+00> : vector<32x128xf32>
    %13 = tpu.matmul %12, %5, %cst {dimension_numbers = #tpu.dot_dimension_numbers<[1], [0], [0], [1], [0, 0, 1, 1], [], []>} : vector<32x128xf32>, vector<128x128xf32>, vector<32x128xf32> -> vector<32x128xf32>
    %c0_5 = arith.constant 0 : index
    %c0_6 = arith.constant 0 : index
    %14 = vector.load %arg4[%c0_5, %c0_6] : memref<32x128xf32, #tpu.memory_space<vmem>>, vector<32x128xf32>
    %cst_7 = arith.constant dense<0.000000e+00> : vector<32x128xf32>
    %15 = tpu.matmul %14, %11, %cst_7 {dimension_numbers = #tpu.dot_dimension_numbers<[1], [0], [0], [1], [0, 0, 1, 1], [], []>} : vector<32x128xf32>, vector<128x128xf32>, vector<32x128xf32> -> vector<32x128xf32>
    %c0_8 = arith.constant 0 : index
    %c0_9 = arith.constant 0 : index
    %16 = vector.load %arg5[%c0_8, %c0_9] : memref<32x32xf32, #tpu.memory_space<vmem>>, vector<32x32xf32>
    %cst_10 = arith.constant dense<0.000000e+00> : vector<32x128xf32>
    %17 = tpu.matmul %16, %13, %cst_10 {dimension_numbers = #tpu.dot_dimension_numbers<[1], [0], [0], [1], [0, 0, 1, 1], [], []>} : vector<32x32xf32>, vector<32x128xf32>, vector<32x128xf32> -> vector<32x128xf32>
    %c0_11 = arith.constant 0 : index
    %c0_12 = arith.constant 0 : index
    %18 = vector.load %arg6[%c0_11, %c0_12] : memref<32x32xf32, #tpu.memory_space<vmem>>, vector<32x32xf32>
    %cst_13 = arith.constant dense<0.000000e+00> : vector<32x128xf32>
    %19 = tpu.matmul %18, %15, %cst_13 {dimension_numbers = #tpu.dot_dimension_numbers<[1], [0], [0], [1], [0, 0, 1, 1], [], []>} : vector<32x32xf32>, vector<32x128xf32>, vector<32x128xf32> -> vector<32x128xf32>
    %20 = arith.addf %17, %19 : vector<32x128xf32>
    %c0_14 = arith.constant 0 : index
    %c0_15 = arith.constant 0 : index
    %21 = vector.load %arg7[%c0_14, %c0_15] : memref<32x1xf32, #tpu.memory_space<vmem>>, vector<32x1xf32>
    %22 = vector.broadcast %21 : vector<32x1xf32> to vector<32x128xf32>
    %23 = arith.addf %20, %22 : vector<32x128xf32>
    %cst_16 = arith.constant 0.000000e+00 : f32
    %24 = vector.broadcast %cst_16 : f32 to vector<32x128xf32>
    %25 = arith.maximumf %23, %24 : vector<32x128xf32>
    %c0_17 = arith.constant 0 : index
    %c0_18 = arith.constant 0 : index
    %26 = vector.load %arg8[%c0_17, %c0_18] : memref<32x1xf32, #tpu.memory_space<vmem>>, vector<32x1xf32>
    %27 = vector.broadcast %26 : vector<32x1xf32> to vector<32x128xf32>
    %28 = arith.mulf %25, %27 : vector<32x128xf32>
    %cst_19 = arith.constant dense<0.000000e+00> : vector<128xf32>
    %29 = vector.multi_reduction <add>, %28, %cst_19 [0] : vector<32x128xf32> to vector<128xf32>
    %30 = vector.shape_cast %29 : vector<128xf32> to vector<1x128xf32>
    %c0_20 = arith.constant 0 : index
    %c0_21 = arith.constant 0 : index
    %31 = memref.load %arg9[%c0_20, %c0_21] : memref<1x1xf32, #tpu.memory_space<smem>>
    %32 = vector.broadcast %31 : f32 to vector<1x128xf32>
    %33 = arith.addf %30, %32 : vector<1x128xf32>
    %34 = arith.negf %33 : vector<1x128xf32>
    %35 = math.exp %34 : vector<1x128xf32>
    %cst_22 = arith.constant 1.000000e+00 : f32
    %36 = vector.broadcast %cst_22 : f32 to vector<1x128xf32>
    %37 = arith.addf %36, %35 : vector<1x128xf32>
    %38 = arith.divf %36, %37 : vector<1x128xf32>
    %c0_23 = arith.constant 0 : index
    %c0_24 = arith.constant 0 : index
    %39 = vector.load %arg10[%c0_23, %c0_24] : memref<1x128xf32, #tpu.memory_space<vmem>>, vector<1x128xf32>
    tpu.vector_store %arg10[%c0_23, %c0_24], %38 {strides = array<i32>} : memref<1x128xf32, #tpu.memory_space<vmem>>, vector<1x128xf32>,
    return
  }
  func.func @transform_0(%arg0: i32) -> (i32, i32) {
    %c0_i32 = arith.constant 0 : i32
    %c0_i32_0 = arith.constant 0 : i32
    return %c0_i32, %arg0 : i32, i32
  }
  func.func @transform_1(%arg0: i32) -> (i32, i32) {
    %c0_i32 = arith.constant 0 : i32
    %c0_i32_0 = arith.constant 0 : i32
    return %c0_i32, %arg0 : i32, i32
  }
  func.func @transform_2(%arg0: i32) -> (i32, i32) {
    %c0_i32 = arith.constant 0 : i32
    %c0_i32_0 = arith.constant 0 : i32
    %c0_i32_1 = arith.constant 0 : i32
    return %c0_i32, %c0_i32_0 : i32, i32
  }
  func.func @transform_3(%arg0: i32) -> (i32, i32) {
    %c0_i32 = arith.constant 0 : i32
    %c0_i32_0 = arith.constant 0 : i32
    %c0_i32_1 = arith.constant 0 : i32
    return %c0_i32, %c0_i32_0 : i32, i32
  }
  func.func @transform_4(%arg0: i32) -> (i32, i32) {
    %c0_i32 = arith.constant 0 : i32
    %c0_i32_0 = arith.constant 0 : i32
    %c0_i32_1 = arith.constant 0 : i32
    return %c0_i32, %c0_i32_0 : i32, i32
  }
  func.func @transform_5(%arg0: i32) -> (i32, i32) {
    %c0_i32 = arith.constant 0 : i32
    %c0_i32_0 = arith.constant 0 : i32
    %c0_i32_1 = arith.constant 0 : i32
    return %c0_i32, %c0_i32_0 : i32, i32
  }
  func.func @transform_6(%arg0: i32) -> (i32, i32) {
    %c0_i32 = arith.constant 0 : i32
    %c0_i32_0 = arith.constant 0 : i32
    %c0_i32_1 = arith.constant 0 : i32
    return %c0_i32, %c0_i32_0 : i32, i32
  }
  func.func @transform_7(%arg0: i32) -> (i32, i32) {
    %c0_i32 = arith.constant 0 : i32
    %c0_i32_0 = arith.constant 0 : i32
    %c0_i32_1 = arith.constant 0 : i32
    return %c0_i32, %c0_i32_0 : i32, i32
  }
  func.func @transform_8(%arg0: i32) -> (i32, i32) {
    %c0_i32 = arith.constant 0 : i32
    %c0_i32_0 = arith.constant 0 : i32
    %c0_i32_1 = arith.constant 0 : i32
    return %c0_i32, %c0_i32_0 : i32, i32
  }
  func.func @transform_9(%arg0: i32) -> (i32, i32) {
    %c0_i32 = arith.constant 0 : i32
    %c0_i32_0 = arith.constant 0 : i32
    return %c0_i32, %arg0 : i32, i32
  }
}

</mosaic_0001>

<llo_original>
// kernel: tpu_custom_call.1
$region0: #{tpu_custom_call.1}
  #allocation0 [shape = 'u32[]', space=smem, size = 0x4, offset = 0x4, fixed_abs, tag = 'smem constant byte address 0x4 - core index']
  #allocation1 [shape = 'u32[72,128]{1,0:T(1,128)}', space=vmem, size = 0x9000, scoped, tag = 'internal scratch']
  #allocation2 [shape = 'f32[1,1]{1,0:T(1,128)S(6)}', space=smem, size = 0x200, scoped, tag = 'scoped memory for tpu_custom_call.1']
  %s0 = inlined_call_operand.vmem [shape: s32[1,128], index: 0, kind: input, shape index: {}]
  %s1 = inlined_call_operand.vmem [shape: s32[1,128], index: 1, kind: input, shape index: {}]
  %s2 = inlined_call_operand.vmem [shape: f32[32,128], index: 2, kind: input, shape index: {}]
  %s3 = inlined_call_operand.vmem [shape: f32[32,128], index: 3, kind: input, shape index: {}]
  %s4 = inlined_call_operand.hbm [shape: f32[32,32], index: 4, kind: input, shape index: {}]
  %s5 = inlined_call_operand.hbm [shape: f32[32,32], index: 5, kind: input, shape index: {}]
  %s6 = inlined_call_operand.vmem [shape: f32[32,1], index: 6, kind: input, shape index: {}]
  %s7 = inlined_call_operand.vmem [shape: f32[32,1], index: 7, kind: input, shape index: {}]
  %s8 = inlined_call_operand.<no memory space> [shape: f32[1,1], index: 8, kind: input, shape index: {}]
  %s9 = inlined_call_operand.hbm [shape: f32[1,128], index: 9, kind: output, shape index: {}]
  %s10 = sld [smem:[#allocation0]]
  $region54: #{tpu_custom_call.1} parent=0
    _
  %s12 = ssub.s32 1, %s10
  %s13 = scalar_select 0, %s12, %s10
  %14 = sst [smem:[#allocation2]] %s8
  $region1: #{tpu_custom_call.1} parent=0
    #allocation3 [shape = 'u8[16384]{0}', space=vmem, size = 0x4000, scoped, tag = 'input window, operand 4, single buffered']
    #allocation4 [shape = 's32[1]{0}', space=sflag, size = 0x4, scoped, tag = 'scoped memory for tpu_custom_call.1']
    #allocation5 [shape = 's32[1]{0}', space=sflag, size = 0x4, scoped, tag = 'scoped memory for tpu_custom_call.1']
    #allocation6 [shape = 'u8[16384]{0}', space=vmem, size = 0x4000, scoped, tag = 'input window, operand 5, single buffered']
    #allocation7 [shape = 's32[1]{0}', space=sflag, size = 0x4, scoped, tag = 'scoped memory for tpu_custom_call.1']
    #allocation8 [shape = 'u8[512]{0}', space=vmem, size = 0x400, scoped, tag = 'output window, operand 0, single buffered']
    %15 = vsyncpa [#allocation4], 0
    %16 = vsyncpa [#allocation7], 0
    %17 = vsyncpa [#allocation5], 0
    // Predicated region
    $region2: #{tpu_custom_call.1} parent=1 // pred_check
      _
    $region3: #{tpu_custom_call.1} parent=1 // pred_check_branch
      %19 = sbr.rel (0) target = $region5
    $region4: #{tpu_custom_call.1} parent=1 // pred_region
      _
    $region5: #{tpu_custom_call.1} parent=1 // pred_fallthru
      _
    // Predicated region
    $region6: #{tpu_custom_call.1} parent=1 // pred_check
      _
    $region7: #{tpu_custom_call.1} parent=1 // pred_check_branch
      %21 = sbr.rel (0) target = $region9
    $region8: #{tpu_custom_call.1} parent=1 // pred_region
      _
    $region9: #{tpu_custom_call.1} parent=1 // pred_fallthru
      _
    // Predicated region
    $region10: #{tpu_custom_call.1} parent=1 // pred_check
      _
    $region11: #{tpu_custom_call.1} parent=1 // pred_check_branch
      %23 = sbr.rel (0) target = $region13
    $region12: #{tpu_custom_call.1} parent=1 // pred_region
      _
    $region13: #{tpu_custom_call.1} parent=1 // pred_fallthru
      _
    // Predicated region
    $region14: #{tpu_custom_call.1} parent=1 // pred_check
      _
    $region15: #{tpu_custom_call.1} parent=1 // pred_check_branch
      %25 = sbr.rel (0) target = $region17
    $region16: #{tpu_custom_call.1} parent=1 // pred_region
      _
    $region17: #{tpu_custom_call.1} parent=1 // pred_fallthru
      _
    // Predicated region
    $region18: #{tpu_custom_call.1} parent=1 // pred_check
      _
    $region19: #{tpu_custom_call.1} parent=1 // pred_check_branch
      %27 = sbr.rel (0) target = $region21
    $region20: #{tpu_custom_call.1} parent=1 // pred_region
      %29 = vsyncadd [#allocation4], 0
      %s30 = sshll.u32 %s4, 4
      %s31 = int_to_ptr.hbm [resolvable:$true] %s30
      %s32 = sshll.u32 [#allocation3], 4
      %s33 = int_to_ptr.vmem [resolvable:$true] %s32
      %38 = dma.hbm_to_vmem [thread:$0]  %s31, 512, %s33, [#allocation4], 128, 128, 8
    $region21: #{tpu_custom_call.1} parent=1 // pred_fallthru
      _
    // Predicated region
    $region22: #{tpu_custom_call.1} parent=1 // pred_check
      _
    $region23: #{tpu_custom_call.1} parent=1 // pred_check_branch
      %40 = sbr.rel (0) target = $region25
    $region24: #{tpu_custom_call.1} parent=1 // pred_region
      %42 = vsyncadd [#allocation7], 0
      %s43 = sshll.u32 %s5, 4
      %s44 = int_to_ptr.hbm [resolvable:$true] %s43
      %s45 = sshll.u32 [#allocation6], 4
      %s46 = int_to_ptr.vmem [resolvable:$true] %s45
      %51 = dma.hbm_to_vmem [thread:$0]  %s44, 512, %s46, [#allocation7], 128, 128, 8
    $region25: #{tpu_custom_call.1} parent=1 // pred_fallthru
      _
    // Predicated region
    $region26: #{tpu_custom_call.1} parent=1 // pred_check
      _
    $region27: #{tpu_custom_call.1} parent=1 // pred_check_branch
      %53 = sbr.rel (0) target = $region29
    $region28: #{tpu_custom_call.1} parent=1 // pred_region
      _
    $region29: #{tpu_custom_call.1} parent=1 // pred_fallthru
      _
    // Predicated region
    $region30: #{tpu_custom_call.1} parent=1 // pred_check
      _
    $region31: #{tpu_custom_call.1} parent=1 // pred_check_branch
      %55 = sbr.rel (0) target = $region33
    $region32: #{tpu_custom_call.1} parent=1 // pred_region
      _
    $region33: #{tpu_custom_call.1} parent=1 // pred_fallthru
      _
    // Predicated region
    $region34: #{tpu_custom_call.1} parent=1 // pred_check
      _
    $region35: #{tpu_custom_call.1} parent=1 // pred_check_branch
      %57 = sbr.rel (0) target = $region37
    $region36: #{tpu_custom_call.1} parent=1 // pred_region
      _
    $region37: #{tpu_custom_call.1} parent=1 // pred_fallthru
      _
    // Predicated region
    $region38: #{tpu_custom_call.1} parent=1 // pred_check
      _
    $region39: #{tpu_custom_call.1} parent=1 // pred_check_branch
      %59 = sbr.rel (0) target = $region41
    $region40: #{tpu_custom_call.1} parent=1 // pred_region
      %61 = dma.done [#allocation4], 512
    $region41: #{tpu_custom_call.1} parent=1 // pred_fallthru
      _
    // Predicated region
    $region42: #{tpu_custom_call.1} parent=1 // pred_check
      _
    $region43: #{tpu_custom_call.1} parent=1 // pred_check_branch
      %63 = sbr.rel (0) target = $region45
    $region44: #{tpu_custom_call.1} parent=1 // pred_region
      %65 = dma.done [#allocation7], 512
    $region45: #{tpu_custom_call.1} parent=1 // pred_fallthru
      _
    %v66 = vlaneseq
    %v67 = vshrl.u32 %v66, 7
    %v68 = vadd.s32 %v67, 8
    %v69 = vadd.s32 %v67, 16
    %v70 = vadd.s32 %v67, 24
    %v71 = vadd.s32 %v67, 32
    %v72 = vadd.s32 %v67, 40
    %v73 = vadd.s32 %v67, 48
    %v74 = vadd.s32 %v67, 56
    %v75 = vadd.s32 %v67, 64
    %v76 = vadd.s32 %v67, 72
    %v77 = vadd.s32 %v67, 80
    %v78 = vadd.s32 %v67, 88
    %v79 = vadd.s32 %v67, 96
    %v80 = vadd.s32 %v67, 104
    %v81 = vadd.s32 %v67, 112
    %v82 = vadd.s32 %v67, 120
    %v83 = vld [vmem:[%s0] sm:$0x1]
    %v84 = vperm.slane %v83, 0
    %vm85 = vcmp.eq.s32.totalorder %v67, %v84
    %vm86 = vcmp.eq.s32.totalorder %v68, %v84
    %vm87 = vcmp.eq.s32.totalorder %v69, %v84
    %vm88 = vcmp.eq.s32.totalorder %v70, %v84
    %vm89 = vcmp.eq.s32.totalorder %v71, %v84
    %vm90 = vcmp.eq.s32.totalorder %v72, %v84
    %vm91 = vcmp.eq.s32.totalorder %v73, %v84
    %vm92 = vcmp.eq.s32.totalorder %v74, %v84
    %vm93 = vcmp.eq.s32.totalorder %v75, %v84
    %vm94 = vcmp.eq.s32.totalorder %v76, %v84
    %vm95 = vcmp.eq.s32.totalorder %v77, %v84
    %vm96 = vcmp.eq.s32.totalorder %v78, %v84
    %vm97 = vcmp.eq.s32.totalorder %v79, %v84
    %vm98 = vcmp.eq.s32.totalorder %v80, %v84
    %vm99 = vcmp.eq.s32.totalorder %v81, %v84
    %vm100 = vcmp.eq.s32.totalorder %v82, %v84
    %v101 = vsel %vm85, 1, 0
    %v102 = vsel %vm86, 1, 0
    %v103 = vsel %vm87, 1, 0
    %v104 = vsel %vm88, 1, 0
    %v105 = vsel %vm89, 1, 0
    %v106 = vsel %vm90, 1, 0
    %v107 = vsel %vm91, 1, 0
    %v108 = vsel %vm92, 1, 0
    %v109 = vsel %vm93, 1, 0
    %v110 = vsel %vm94, 1, 0
    %v111 = vsel %vm95, 1, 0
    %v112 = vsel %vm96, 1, 0
    %v113 = vsel %vm97, 1, 0
    %v114 = vsel %vm98, 1, 0
    %v115 = vsel %vm99, 1, 0
    %v116 = vsel %vm100, 1, 0
    %v117 = vcvt.s32.f32 %v101
    %v118 = vcvt.s32.f32 %v102
    %v119 = vcvt.s32.f32 %v103
    %v120 = vcvt.s32.f32 %v104
    %v121 = vcvt.s32.f32 %v105
    %v122 = vcvt.s32.f32 %v106
    %v123 = vcvt.s32.f32 %v107
    %v124 = vcvt.s32.f32 %v108
    %v125 = vcvt.s32.f32 %v109
    %v126 = vcvt.s32.f32 %v110
    %v127 = vcvt.s32.f32 %v111
    %v128 = vcvt.s32.f32 %v112
    %v129 = vcvt.s32.f32 %v113
    %v130 = vcvt.s32.f32 %v114
    %v131 = vcvt.s32.f32 %v115
    %v132 = vcvt.s32.f32 %v116
    %v133 = vld [vmem:[%s1] sm:$0x1]
    %v134 = vperm.slane %v133, 0
    %vm135 = vcmp.eq.s32.totalorder %v67, %v134
    %vm136 = vcmp.eq.s32.totalorder %v68, %v134
    %vm137 = vcmp.eq.s32.totalorder %v69, %v134
    %vm138 = vcmp.eq.s32.totalorder %v70, %v134
    %vm139 = vcmp.eq.s32.totalorder %v71, %v134
    %vm140 = vcmp.eq.s32.totalorder %v72, %v134
    %vm141 = vcmp.eq.s32.totalorder %v73, %v134
    %vm142 = vcmp.eq.s32.totalorder %v74, %v134
    %vm143 = vcmp.eq.s32.totalorder %v75, %v134
    %vm144 = vcmp.eq.s32.totalorder %v76, %v134
    %vm145 = vcmp.eq.s32.totalorder %v77, %v134
    %vm146 = vcmp.eq.s32.totalorder %v78, %v134
    %vm147 = vcmp.eq.s32.totalorder %v79, %v134
    %vm148 = vcmp.eq.s32.totalorder %v80, %v134
    %vm149 = vcmp.eq.s32.totalorder %v81, %v134
    %vm150 = vcmp.eq.s32.totalorder %v82, %v134
    %v151 = vsel %vm135, 1, 0
    %v152 = vsel %vm136, 1, 0
    %v153 = vsel %vm137, 1, 0
    %v154 = vsel %vm138, 1, 0
    %v155 = vsel %vm139, 1, 0
    %v156 = vsel %vm140, 1, 0
    %v157 = vsel %vm141, 1, 0
    %v158 = vsel %vm142, 1, 0
    %v159 = vsel %vm143, 1, 0
    %v160 = vsel %vm144, 1, 0
    %v161 = vsel %vm145, 1, 0
    %v162 = vsel %vm146, 1, 0
    %v163 = vsel %vm147, 1, 0
    %v164 = vsel %vm148, 1, 0
    %v165 = vsel %vm149, 1, 0
    %v166 = vsel %vm150, 1, 0
    %v167 = vcvt.s32.f32 %v151
    %v168 = vcvt.s32.f32 %v152
    %v169 = vcvt.s32.f32 %v153
    %v170 = vcvt.s32.f32 %v154
    %v171 = vcvt.s32.f32 %v155
    %v172 = vcvt.s32.f32 %v156
    %v173 = vcvt.s32.f32 %v157
    %v174 = vcvt.s32.f32 %v158
    %v175 = vcvt.s32.f32 %v159
    %v176 = vcvt.s32.f32 %v160
    %v177 = vcvt.s32.f32 %v161
    %v178 = vcvt.s32.f32 %v162
    %v179 = vcvt.s32.f32 %v163
    %v180 = vcvt.s32.f32 %v164
    %v181 = vcvt.s32.f32 %v165
    %v182 = vcvt.s32.f32 %v166
    %v183 = vld [vmem:[%s2] sm:$0xff]
    %v184 = vld [vmem:[%s2 + $0x8] sm:$0xff]
    %v185 = vld [vmem:[%s2 + $0x10] sm:$0xff]
    %v186 = vld [vmem:[%s2 + $0x18] sm:$0xff]
    %187 = vmatpush.msra.mxu0 %v132
    %188 = vmatpush.msra.mxu0 %v131
    %189 = vmatpush.msra.mxu0 %v130
    %190 = vmatpush.msra.mxu0 %v129
    %191 = vmatpush.msra.mxu0 %v128
    %192 = vmatpush.msra.mxu0 %v127
    %193 = vmatpush.msra.mxu0 %v126
    %194 = vmatpush.msra.mxu0 %v125
    %195 = vmatpush.msra.mxu0 %v124
    %196 = vmatpush.msra.mxu0 %v123
    %197 = vmatpush.msra.mxu0 %v122
    %198 = vmatpush.msra.mxu0 %v121
    %199 = vmatpush.msra.mxu0 %v120
    %200 = vmatpush.msra.mxu0 %v119
    %201 = vmatpush.msra.mxu0 %v118
    %202 = vmatpush.msra.mxu0 %v117
    %203 = vmatmul.f32.gmra.mxu0 %v183
    %v204 = vpop.f32.mrf.mxu0
    %v205 = vadd.f32 0.0, %v204
    %206 = vmatmul.f32.gmra.mxu0 %v184
    %v207 = vpop.f32.mrf.mxu0
    %v208 = vadd.f32 0.0, %v207
    %209 = vmatmul.f32.gmra.mxu0 %v185
    %v210 = vpop.f32.mrf.mxu0
    %v211 = vadd.f32 0.0, %v210
    %212 = vmatmul.f32.gmra.mxu0 %v186
    %v213 = vpop.f32.mrf.mxu0
    %v214 = vadd.f32 0.0, %v213
    %215 = vdwg.mxu0
    %v216 = vld [vmem:[%s3] sm:$0xff]
    %v217 = vld [vmem:[%s3 + $0x8] sm:$0xff]
    %v218 = vld [vmem:[%s3 + $0x10] sm:$0xff]
    %v219 = vld [vmem:[%s3 + $0x18] sm:$0xff]
    %220 = vmatpush.msra.mxu0 %v182
    %221 = vmatpush.msra.mxu0 %v181
    %222 = vmatpush.msra.mxu0 %v180
    %223 = vmatpush.msra.mxu0 %v179
    %224 = vmatpush.msra.mxu0 %v178
    %225 = vmatpush.msra.mxu0 %v177
    %226 = vmatpush.msra.mxu0 %v176
    %227 = vmatpush.msra.mxu0 %v175
    %228 = vmatpush.msra.mxu0 %v174
    %229 = vmatpush.msra.mxu0 %v173
    %230 = vmatpush.msra.mxu0 %v172
    %231 = vmatpush.msra.mxu0 %v171
    %232 = vmatpush.msra.mxu0 %v170
    %233 = vmatpush.msra.mxu0 %v169
    %234 = vmatpush.msra.mxu0 %v168
    %235 = vmatpush.msra.mxu0 %v167
    %236 = vmatmul.f32.gmra.mxu0 %v216
    %v237 = vpop.f32.mrf.mxu0
    %v238 = vadd.f32 0.0, %v237
    %239 = vmatmul.f32.gmra.mxu0 %v217
    %v240 = vpop.f32.mrf.mxu0
    %v241 = vadd.f32 0.0, %v240
    %242 = vmatmul.f32.gmra.mxu0 %v218
    %v243 = vpop.f32.mrf.mxu0
    %v244 = vadd.f32 0.0, %v243
    %245 = vmatmul.f32.gmra.mxu0 %v219
    %v246 = vpop.f32.mrf.mxu0
    %v247 = vadd.f32 0.0, %v246
    %248 = vdwg.mxu0
    %v249 = vld [vmem:[#allocation3] sm:$0xff]
    %v250 = vld [vmem:[#allocation3 + $0x8] sm:$0xff]
    %v251 = vld [vmem:[#allocation3 + $0x10] sm:$0xff]
    %v252 = vld [vmem:[#allocation3 + $0x18] sm:$0xff]
    %v253 = vld [vmem:[#allocation6] sm:$0xff]
    %v254 = vld [vmem:[#allocation6 + $0x8] sm:$0xff]
    %v255 = vld [vmem:[#allocation6 + $0x10] sm:$0xff]
    %v256 = vld [vmem:[#allocation6 + $0x18] sm:$0xff]
    %vm257 = vcmask 261120
    %v259 = vsel %vm257, %v253, 0
    %v262 = vsel %vm257, %v254, 0
    %v265 = vsel %vm257, %v255, 0
    %v268 = vsel %vm257, %v256, 0
    %270 = vmatpush.msra.mxu0 0.0
    %271 = vmatpush.msra.mxu0 0.0
    %272 = vmatpush.msra.mxu0 0.0
    %273 = vmatpush.msra.mxu0 0.0
    %274 = vmatpush.msra.mxu0 0.0
    %275 = vmatpush.msra.mxu0 0.0
    %276 = vmatpush.msra.mxu0 0.0
    %277 = vmatpush.msra.mxu0 0.0
    %278 = vmatpush.msra.mxu0 0.0
    %279 = vmatpush.msra.mxu0 0.0
    %280 = vmatpush.msra.mxu0 0.0
    %281 = vmatpush.msra.mxu0 0.0
    %282 = vmatpush.msra.mxu0 %v247
    %283 = vmatpush.msra.mxu0 %v244
    %284 = vmatpush.msra.mxu0 %v241
    %285 = vmatpush.msra.mxu0 %v238
    %286 = vmatmul.f32.gmra.mxu0 %v259
    %v287 = vpop.f32.mrf.mxu0
    %v288 = vadd.f32 0.0, %v287
    %289 = vmatmul.f32.gmra.mxu0 %v262
    %v290 = vpop.f32.mrf.mxu0
    %v291 = vadd.f32 0.0, %v290
    %292 = vmatmul.f32.gmra.mxu0 %v265
    %v293 = vpop.f32.mrf.mxu0
    %v294 = vadd.f32 0.0, %v293
    %295 = vmatmul.f32.gmra.mxu0 %v268
    %v296 = vpop.f32.mrf.mxu0
    %v297 = vadd.f32 0.0, %v296
    %298 = vdwg.mxu0
    %v300 = vsel %vm257, %v249, 0
    %v303 = vsel %vm257, %v250, 0
    %v306 = vsel %vm257, %v251, 0
    %v309 = vsel %vm257, %v252, 0
    %311 = vmatpush.msra.mxu0 0.0
    %312 = vmatpush.msra.mxu0 0.0
    %313 = vmatpush.msra.mxu0 0.0
    %314 = vmatpush.msra.mxu0 0.0
    %315 = vmatpush.msra.mxu0 0.0
    %316 = vmatpush.msra.mxu0 0.0
    %317 = vmatpush.msra.mxu0 0.0
    %318 = vmatpush.msra.mxu0 0.0
    %319 = vmatpush.msra.mxu0 0.0
    %320 = vmatpush.msra.mxu0 0.0
    %321 = vmatpush.msra.mxu0 0.0
    %322 = vmatpush.msra.mxu0 0.0
    %323 = vmatpush.msra.mxu0 %v214
    %324 = vmatpush.msra.mxu0 %v211
    %325 = vmatpush.msra.mxu0 %v208
    %326 = vmatpush.msra.mxu0 %v205
    %327 = vmatmul.f32.gmra.mxu0 %v300
    %v328 = vpop.f32.mrf.mxu0
    %v329 = vadd.f32 %v288, %v328
    %330 = vmatmul.f32.gmra.mxu0 %v303
    %v331 = vpop.f32.mrf.mxu0
    %v332 = vadd.f32 %v291, %v331
    %333 = vmatmul.f32.gmra.mxu0 %v306
    %v334 = vpop.f32.mrf.mxu0
    %v335 = vadd.f32 %v294, %v334
    %336 = vmatmul.f32.gmra.mxu0 %v309
    %v337 = vpop.f32.mrf.mxu0
    %v338 = vadd.f32 %v297, %v337
    %339 = vdwg.mxu0
    %v340 = vld [vmem:[%s6] sm:$0xff]
    %v341 = vld [vmem:[%s6 + $0x8] sm:$0xff]
    %v342 = vld [vmem:[%s6 + $0x10] sm:$0xff]
    %v343 = vld [vmem:[%s6 + $0x18] sm:$0xff]
    %345 = vset.pattern.permute.xlu0 0
    %346 = vperm.xlu0 %345, %v340
    %v347 = vpop.permute.xlu0 %346
    %350 = vset.pattern.permute.xlu0 0
    %351 = vperm.xlu0 %350, %v341
    %v352 = vpop.permute.xlu0 %351
    %355 = vset.pattern.permute.xlu0 0
    %356 = vperm.xlu0 %355, %v342
    %v357 = vpop.permute.xlu0 %356
    %360 = vset.pattern.permute.xlu0 0
    %361 = vperm.xlu0 %360, %v343
    %v362 = vpop.permute.xlu0 %361
    %v364 = vadd.f32 %v329, %v347
    %v365 = vadd.f32 %v332, %v352
    %v366 = vadd.f32 %v335, %v357
    %v367 = vadd.f32 %v338, %v362
    %v368 = vmax.f32 %v364, 0.0
    %v369 = vmax.f32 %v365, 0.0
    %v370 = vmax.f32 %v366, 0.0
    %v371 = vmax.f32 %v367, 0.0
    %v372 = vld [vmem:[%s7] sm:$0xff]
    %v373 = vld [vmem:[%s7 + $0x8] sm:$0xff]
    %v374 = vld [vmem:[%s7 + $0x10] sm:$0xff]
    %v375 = vld [vmem:[%s7 + $0x18] sm:$0xff]
    %377 = vset.pattern.permute.xlu0 0
    %378 = vperm.xlu0 %377, %v372
    %v379 = vpop.permute.xlu0 %378
    %382 = vset.pattern.permute.xlu0 0
    %383 = vperm.xlu0 %382, %v373
    %v384 = vpop.permute.xlu0 %383
    %387 = vset.pattern.permute.xlu0 0
    %388 = vperm.xlu0 %387, %v374
    %v389 = vpop.permute.xlu0 %388
    %392 = vset.pattern.permute.xlu0 0
    %393 = vperm.xlu0 %392, %v375
    %v394 = vpop.permute.xlu0 %393
    %v396 = vmul.f32 %v368, %v379
    %v397 = vmul.f32 %v369, %v384
    %v398 = vmul.f32 %v370, %v389
    %v399 = vmul.f32 %v371, %v394
    %v400 = vadd.f32 %v396, %v397
    %v401 = vadd.f32 %v400, %v398
    %v402 = vadd.f32 %v401, %v399
    %v403 = vrot.slane %v402, 4
    %v404 = vadd.f32 %v402, %v403
    %v405 = vrot.slane %v404, 2
    %v406 = vadd.f32 %v404, %v405
    %v407 = vrot.slane %v406, 1
    %v408 = vadd.f32 %v406, %v407
    %s409 = sld [smem:[#allocation2]]
    %v410 = vstv %s409
    %v411 = vadd.f32 %v408, %v410
    %v412 = vxor.u32 %v411, 2147483648
    %v413 = vmul.f32 %v412, 1.442695
    %v414 = vpow.pop %v413
    %v415 = vadd.f32 %v414, 1.0
    %v416 = vrcp.pop %v415
    %v417 = vmul.f32 %v415, %v416
    %v418 = vsub.f32 1.0, %v417
    %v419 = vmul.f32 %v416, %v418
    %v420 = vadd.f32 %v416, %v419
    %vm421 = vweird.f32 %v415
    %vm422 = vweird.f32 %v416
    %vm423 = vmor %vm421, %vm422
    %v424 = vsel %vm423, %v416, %v420
    %v425 = vand.u32 2147483647, %v415
    %vm426 = vcmp.eq.f32.partialorder %v425, 8.507059e+37
    %v427 = vand.u32 %v415, 2147483648
    %v428 = vor.u32 1.1754944e-38, %v427
    %v429 = vsel %vm426, %v428, %v424
    %v430 = vmul.f32 1.0, %v429
    %431 = vst [vmem:[#allocation8] sm:$0x1] %v430
    // Predicated region
    $region46: #{tpu_custom_call.1} parent=1 // pred_check
      _
    $region47: #{tpu_custom_call.1} parent=1 // pred_check_branch
      %433 = sbr.rel (0) target = $region49
    $region48: #{tpu_custom_call.1} parent=1 // pred_region
      %435 = vsyncadd [#allocation5], 0
      %s437 = sshll.u32 [#allocation8], 4
      %s438 = int_to_ptr.vmem [resolvable:$true] %s437
      %s439 = sshll.u32 %s9, 4
      %s440 = int_to_ptr.hbm [resolvable:$true] %s439
      %442 = dma.vmem_to_hbm [thread:$0]  %s438, 16, %s440, [#allocation5]
    $region49: #{tpu_custom_call.1} parent=1 // pred_fallthru
      _
    // Predicated region
    $region50: #{tpu_custom_call.1} parent=1 // pred_check
      _
    $region51: #{tpu_custom_call.1} parent=1 // pred_check_branch
      %444 = sbr.rel (0) target = $region53
    $region52: #{tpu_custom_call.1} parent=1 // pred_region
      %446 = dma.done [#allocation5], 16
    $region53: #{tpu_custom_call.1} parent=1 // pred_fallthru
      _
    %447 = vsyncpa [#allocation4], 1
    %448 = vsyncpa [#allocation7], 1
    %449 = vsyncpa [#allocation5], 1

</llo_original>
